<compile_context>
chip_gen: v7x
topology: tpu7x:2x2x1
jax: 0.10.0
libtpu: 0.0.40
codegen_flags: <defaults>
</compile_context>

<pallas_src>
import functools

import jax
import jax.numpy as jnp
from jax.experimental import pallas as pl
from jax.experimental.pallas import tpu as pltpu


def _round_up(x, m):
    return ((x + m - 1) // m) * m


def _sublane_multiple(dtype):
    return {4: 8, 2: 16, 1: 32}[jnp.dtype(dtype).itemsize]


def _pick_tn(h_pad, tn_target):
    """Largest divisor of h_pad that is a multiple of 128 and <= tn_target."""
    m = h_pad // 128
    best = 128
    for d in range(1, m + 1):
        if m % d == 0 and d * 128 <= tn_target:
            best = d * 128
    return best


def _pick_bb(batch, target):
    """Batches per block: prefer a divisor of `batch` near `target` (no batch pad)."""
    target = max(1, min(batch, target))
    divs = [d for d in range(1, batch + 1) if batch % d == 0]
    cands = [d for d in divs if target <= d <= 2 * target]
    if cands:
        return min(cands)
    best = max(d for d in divs if d <= target)
    if 2 * best >= target:
        return best
    return target  # accept batch padding


def _mfb_expand_kernel(x_ref, q_ref, w_ref, b_ref, o_ref, *,
                       mxu_dtype, w_resident, tn, h_axis):
    """One (batch-block, H-block) tile.

    x_ref: (bb, L_pad, D)          image features (original or compute dtype)
    q_ref: (bb, 1, tn)             precomputed question linear (hoisted), f32
    w_ref: (D, H_pad) if resident  (sliced in-kernel) else (D, tn) tile
    b_ref: (1, tn)                 image linear bias tile, f32
    o_ref: (bb, L_pad, tn)         joint feature tile
    """
    bb, lp, d = x_ref.shape
    if w_resident:
        col = pl.multiple_of(pl.program_id(h_axis) * tn, 128)
        w = w_ref[:, pl.ds(col, tn)]
    else:
        w = w_ref[...]

    # Feed the MXU one (bb*L_pad, D) x (D, tn) matmul.  L_pad is a multiple of the
    # dtype's sublane tile, so this reshape is layout-preserving (no relayout copy).
    x2d = x_ref[...].reshape(bb * lp, d)
    if x2d.dtype != mxu_dtype:
        x2d = x2d.astype(mxu_dtype)           # VPU cast in VMEM (avoids an HBM pass)
    acc = jnp.dot(x2d, w, preferred_element_type=jnp.float32)      # f32 accumulation
    image1 = acc.reshape(bb, lp, tn) + b_ref[...].astype(jnp.float32)

    joint = image1 * q_ref[...].astype(jnp.float32)  # (bb,1,tn) broadcasts over L
    # dropout == identity (eval mode)
    o_ref[...] = joint.astype(o_ref.dtype)


def mfb_expand(image_feat, question_embed, params, *,
               compute_dtype=jnp.bfloat16, out_dtype=None,
               tn=None, target_rows=None):
    """Pallas implementation of MfbExpand.forward (eval mode).

    image_feat:      (B, L, D_img) or (B, D_img)
    question_embed:  (B, D_q)
    params: W_img (D_img, H), b_img (H,), W_q (D_q, H), b_q (H,)
            (W_* are the transposed nn.Linear weights.)
    Returns joint_feature with shape (B, L, H) (or (B, H) for 2-D image_feat).
    """
    squeeze_loc = image_feat.ndim == 2
    if squeeze_loc:
        image_feat = image_feat[:, None, :]
    B, L, D = image_feat.shape
    H = params["W_img"].shape[1]
    if out_dtype is None:
        out_dtype = image_feat.dtype

    # ---- Hoisted question branch: one small XLA matmul (would starve the MXU). ----
    ques1 = (question_embed.astype(jnp.float32) @ params["W_q"].astype(jnp.float32)
             + params["b_q"].astype(jnp.float32))                        # (B, H) f32

    # ---- Generation-aware budgets. ----
    vmem_cap = 128 << 20
    try:
        vmem_cap = int(pltpu.get_tpu_info().vmem_capacity_bytes)
    except Exception:
        pass
    vmem_limit = int(vmem_cap * 0.75)          # never above ~75% of physical VMEM (v7x 64 MiB safe)
    big_vmem = vmem_cap >= (96 << 20)          # v5e/v6e (128 MiB) vs v7x (64 MiB)
    if tn is None:
        tn = 1024 if big_vmem else 512
    if target_rows is None:
        target_rows = 512 if big_vmem else 256

    LANE = 128
    H_pad = _round_up(H, LANE)
    tn = _pick_tn(H_pad, max(LANE, tn))

    w_dtype = jnp.dtype(compute_dtype)
    w_item = w_dtype.itemsize
    o_item = jnp.dtype(out_dtype).itemsize

    # ---- x storage & dtype-aware sublane padding. ----
    sub_in = _sublane_multiple(image_feat.dtype)
    L_pad = _round_up(L, sub_in)
    bb = _pick_bb(B, pl.cdiv(target_rows, L_pad))
    need_pad_x = (L_pad != L) or (B % bb != 0)
    if need_pad_x:
        # Host-side materialization is needed anyway -> fold the compute-dtype cast in,
        # and re-derive the sublane pad for that (packed) dtype.
        x_store_dtype = w_dtype
        L_pad = _round_up(L, _sublane_multiple(x_store_dtype))
        bb = _pick_bb(B, pl.cdiv(target_rows, L_pad))
    else:
        # Zero-copy: pass image_feat straight through; cast to MXU dtype inside kernel.
        x_store_dtype = jnp.dtype(image_feat.dtype)
    x_item = x_store_dtype.itemsize
    B_pad = _round_up(B, bb)
    need_pad_x = need_pad_x or (B_pad > B) or (L_pad > L)

    # ---- VMEM fit (double-buffered blocks) & W residency decision. ----
    def _blk_bytes(bb_, tn_, resident_):
        x_b = bb_ * L_pad * D * x_item
        q_b = bb_ * tn_ * 4
        b_b = tn_ * 4
        o_b = bb_ * L_pad * tn_ * o_item
        w_b = (D * H_pad if resident_ else D * tn_) * w_item
        return 2 * (x_b + q_b + b_b + o_b + w_b)

    w_full_bytes = D * H_pad * w_item
    w_resident = (2 * w_full_bytes) <= int(0.35 * vmem_cap)

    while _blk_bytes(bb, tn, w_resident) > vmem_limit:
        if tn > LANE:
            tn = _pick_tn(H_pad, tn // 2)
        elif w_resident:
            w_resident = False
        elif bb > 1:
            bb = max(1, bb // 2)
            new_B_pad = _round_up(B, bb)
            if new_B_pad > B and not need_pad_x:
                need_pad_x = True              # keep original dtype; just zero-pad batch
            B_pad = new_B_pad
        else:
            break

    # ---- Operand construction: skip host-side pad passes when already aligned. ----
    if need_pad_x:
        x = jnp.zeros((B_pad, L_pad, D), x_store_dtype).at[:B, :L, :].set(
            image_feat.astype(x_store_dtype))
    else:
        x = image_feat                                        # no extra HBM pass

    if H_pad == H and jnp.dtype(params["W_img"].dtype) == w_dtype:
        w = params["W_img"]
    else:
        w = jnp.zeros((D, H_pad), w_dtype).at[:, :H].set(params["W_img"].astype(w_dtype))

    if H_pad == H:
        b = params["b_img"].astype(jnp.float32).reshape(1, H)
    else:
        b = jnp.zeros((1, H_pad), jnp.float32).at[0, :H].set(
            params["b_img"].astype(jnp.float32))

    if H_pad == H and B_pad == B:
        q = ques1.reshape(B, 1, H)
    else:
        q = jnp.zeros((B_pad, 1, H_pad), jnp.float32).at[:B, 0, :H].set(ques1)

    nb = B_pad // bb
    nh = H_pad // tn

    # ---- Grid / BlockSpecs: keep both x and W single-pass whenever possible. ----
    if w_resident:
        # Whole W resident in VMEM (constant index map -> fetched once); batch is the
        # leading "parallel" axis so v7x megacore shards disjoint halves of x.
        order = "resident"
        grid = (nb, nh)
        h_axis = 1
        x_spec = pl.BlockSpec((bb, L_pad, D), lambda bi, ni: (bi, 0, 0))
        q_spec = pl.BlockSpec((bb, 1, tn), lambda bi, ni: (bi, 0, ni))
        w_spec = pl.BlockSpec((D, H_pad), lambda bi, ni: (0, 0))
        b_spec = pl.BlockSpec((1, tn), lambda bi, ni: (0, ni))
        o_spec = pl.BlockSpec((bb, L_pad, tn), lambda bi, ni: (bi, 0, ni))
        x_reads, w_reads = 1, 1
    else:
        # W too big to keep resident: pick the grid order whose re-streamed operand
        # costs less total HBM traffic.
        x_bytes = B_pad * L_pad * D * x_item
        w_bytes = D * H_pad * w_item
        if (nb - 1) * w_bytes <= (nh - 1) * x_bytes:
            order = "batch_outer"              # W re-read once per batch block
            grid = (nb, nh)
            h_axis = 1
            x_spec = pl.BlockSpec((bb, L_pad, D), lambda bi, ni: (bi, 0, 0))
            q_spec = pl.BlockSpec((bb, 1, tn), lambda bi, ni: (bi, 0, ni))
            w_spec = pl.BlockSpec((D, tn), lambda bi, ni: (0, ni))
            b_spec = pl.BlockSpec((1, tn), lambda bi, ni: (0, ni))
            o_spec = pl.BlockSpec((bb, L_pad, tn), lambda bi, ni: (bi, 0, ni))
            x_reads, w_reads = 1, nb
        else:
            order = "h_outer"                  # x re-read once per H block
            grid = (nh, nb)
            h_axis = 0
            x_spec = pl.BlockSpec((bb, L_pad, D), lambda ni, bi: (bi, 0, 0))
            q_spec = pl.BlockSpec((bb, 1, tn), lambda ni, bi: (bi, 0, ni))
            w_spec = pl.BlockSpec((D, tn), lambda ni, bi: (0, ni))
            b_spec = pl.BlockSpec((1, tn), lambda ni, bi: (0, ni))
            o_spec = pl.BlockSpec((bb, L_pad, tn), lambda ni, bi: (bi, 0, ni))
            x_reads, w_reads = nh, 1
    del order  # (kept only for readability while choosing specs)

    blk = _blk_bytes(bb, tn, w_resident)
    vmem_bytes = min(vmem_limit, int(blk * 1.25) + (4 << 20))

    flops = 2 * B_pad * L_pad * D * H_pad + 2 * B_pad * L_pad * H_pad
    bytes_accessed = (B_pad * L_pad * D * x_item * x_reads
                      + D * H_pad * w_item * w_reads
                      + B_pad * H_pad * 4 + H_pad * 4
                      + B_pad * L_pad * H_pad * o_item)

    kernel = functools.partial(_mfb_expand_kernel,
                               mxu_dtype=w_dtype, w_resident=w_resident,
                               tn=tn, h_axis=h_axis)

    out = pl.pallas_call(
        kernel,
        out_shape=jax.ShapeDtypeStruct((B_pad, L_pad, H_pad), out_dtype),
        grid_spec=pltpu.PrefetchScalarGridSpec(
            num_scalar_prefetch=0,
            grid=grid,
            in_specs=[x_spec, q_spec, w_spec, b_spec],
            out_specs=o_spec,
        ),
        compiler_params=pltpu.CompilerParams(
            dimension_semantics=("parallel", "parallel"),
            vmem_limit_bytes=vmem_bytes),
        cost_estimate=pl.CostEstimate(
            flops=flops, transcendentals=0, bytes_accessed=bytes_accessed),
    )(x, q, w, b)

    # Padded L rows / H cols / batches are garbage-but-finite; slice only when padded.
    if (B_pad, L_pad, H_pad) != (B, L, H):
        out = out[:B, :L, :H]
    if squeeze_loc:
        out = out[:, 0, :]
    return out


def _reference(image_feat, question_embed, params):
    image1 = image_feat @ params["W_img"] + params["b_img"]
    ques1 = question_embed @ params["W_q"] + params["b_q"]
    if image_feat.ndim == 3:
        ques1 = ques1[:, None, :]
    return image1 * ques1          # dropout == identity (eval)


if __name__ == "__main__":
    B, L = 2, 8                     # batch, num_location
    D_img, D_q, H = 32, 16, 32      # image_feat_dim, ques_emb_dim, hidden_size

    key = jax.random.PRNGKey(0)
    k = jax.random.split(key, 6)
    image_feat = jax.random.normal(k[0], (B, L, D_img), dtype=jnp.float32)
    question_embed = jax.random.normal(k[1], (B, D_q), dtype=jnp.float32)
    scale = 0.1
    params = {
        "W_img": scale * jax.random.normal(k[2], (D_img, H), dtype=jnp.float32),
        "b_img": scale * jax.random.normal(k[3], (H,), dtype=jnp.float32),
        "W_q":   scale * jax.random.normal(k[4], (D_q, H), dtype=jnp.float32),
        "b_q":   scale * jax.random.normal(k[5], (H,), dtype=jnp.float32),
    }
    ref = _reference(image_feat, question_embed, params)

    # 3-D image_feat path, exact f32 compute.
    out = jax.block_until_ready(
        mfb_expand(image_feat, question_embed, params, compute_dtype=jnp.float32))
    assert out.shape == (B, L, H)
    assert jnp.allclose(out, ref, atol=1e-5, rtol=1e-5), "3-D f32 path mismatch"

    # 2-D image_feat path (module's `else` branch: no location dim), f32 compute.
    out2 = jax.block_until_ready(
        mfb_expand(image_feat[:, 0, :], question_embed, params,
                   compute_dtype=jnp.float32))
    ref2 = _reference(image_feat[:, 0, :], question_embed, params)
    assert out2.shape == (B, H)
    assert jnp.allclose(out2, ref2, atol=1e-5, rtol=1e-5), "2-D f32 path mismatch"

    # Default production path: bf16 x/W on the MXU, f32 accumulation, f32 output.
    out_bf = jax.block_until_ready(mfb_expand(image_feat, question_embed, params))
    assert out_bf.shape == (B, L, H)
    assert jnp.allclose(out_bf, ref, atol=5e-2, rtol=5e-2), "bf16 default path mismatch"

    # bf16 output dtype (halves the dominant output HBM stream).
    out_lo = jax.block_until_ready(
        mfb_expand(image_feat, question_embed, params, out_dtype=jnp.bfloat16))
    assert out_lo.dtype == jnp.bfloat16 and out_lo.shape == (B, L, H)
    assert jnp.allclose(out_lo.astype(jnp.float32), ref, atol=8e-2, rtol=8e-2)

    # Unaligned L / odd B path (exercises dtype-aware sublane pad + batch blocking).
    B2, L2, D2, H2 = 3, 10, 48, 160
    kk = jax.random.split(jax.random.PRNGKey(1), 6)
    image_feat2 = jax.random.normal(kk[0], (B2, L2, D2), dtype=jnp.float32)
    question_embed2 = jax.random.normal(kk[1], (B2, D_q), dtype=jnp.float32)
    params2 = {
        "W_img": scale * jax.random.normal(kk[2], (D2, H2), dtype=jnp.float32),
        "b_img": scale * jax.random.normal(kk[3], (H2,), dtype=jnp.float32),
        "W_q":   scale * jax.random.normal(kk[4], (D_q, H2), dtype=jnp.float32),
        "b_q":   scale * jax.random.normal(kk[5], (H2,), dtype=jnp.float32),
    }
    out3 = jax.block_until_ready(mfb_expand(image_feat2, question_embed2, params2))
    ref3 = _reference(image_feat2, question_embed2, params2)
    assert out3.shape == (B2, L2, H2)
    assert jnp.allclose(out3, ref3, atol=8e-2, rtol=8e-2), "padded bf16 path mismatch"

    print("KERNEL_OK")
</pallas_src>

<mosaic_0001>
module attributes {stable_mosaic.version = 11 : i64} {
  func.func @_mfb_expand_kernel(%arg0: i32, %arg1: i32, %arg2: memref<2x8x32xf32, #tpu.memory_space<vmem>>, %arg3: memref<2x1x128xf32, #tpu.memory_space<vmem>>, %arg4: memref<32x128xf32, #tpu.memory_space<vmem>>, %arg5: memref<1x128xf32, #tpu.memory_space<vmem>>, %arg6: memref<2x8x128xf32, #tpu.memory_space<vmem>>) attributes {dimension_semantics = [#tpu.dimension_semantics<parallel>, #tpu.dimension_semantics<parallel>], iteration_bounds = array<i64: 1, 1>, scalar_prefetch = 0 : i64, scratch_operands = 0 : i64, tpu.core_type = #tpu.core_type<tc>, window_params = [{transform_indices = @transform_0, window_bounds = array<i64: 2, 8, 32>}, {transform_indices = @transform_1, window_bounds = array<i64: 2, 1, 128>}, {pipeline_mode = #tpu.pipeline_mode<synchronous>, transform_indices = @transform_2, window_bounds = array<i64: 32, 128>}, {transform_indices = @transform_3, window_bounds = array<i64: 1, 128>}, {transform_indices = @transform_4, window_bounds = array<i64: 2, 8, 128>}]} {
    %c128_i32 = arith.constant 128 : i32
    %0 = arith.muli %arg1, %c128_i32 : i32
    %1 = tpu.assume_multiple %0, 128 : i32
    %c0 = arith.constant 0 : index
    %2 = arith.index_cast %1 : i32 to index
    %3 = vector.load %arg4[%c0, %2] : memref<32x128xf32, #tpu.memory_space<vmem>>, vector<32x128xf32>
    %c0_0 = arith.constant 0 : index
    %c0_1 = arith.constant 0 : index
    %c0_2 = arith.constant 0 : index
    %4 = vector.load %arg2[%c0_0, %c0_1, %c0_2] : memref<2x8x32xf32, #tpu.memory_space<vmem>>, vector<2x8x32xf32>
    %5 = vector.shape_cast %4 : vector<2x8x32xf32> to vector<16x32xf32>
    %cst = arith.constant dense<0.000000e+00> : vector<16x128xf32>
    %6 = tpu.matmul %5, %3, %cst {dimension_numbers = #tpu.dot_dimension_numbers<[1], [0], [0], [1], [0, 0, 1, 1], [], []>} : vector<16x32xf32>, vector<32x128xf32>, vector<16x128xf32> -> vector<16x128xf32>
    %7 = vector.shape_cast %6 : vector<16x128xf32> to vector<2x8x128xf32>
    %c0_3 = arith.constant 0 : index
    %c0_4 = arith.constant 0 : index
    %8 = vector.load %arg5[%c0_3, %c0_4] : memref<1x128xf32, #tpu.memory_space<vmem>>, vector<1x128xf32>
    %9 = vector.shape_cast %8 : vector<1x128xf32> to vector<1x1x128xf32>
    %10 = vector.broadcast %9 : vector<1x1x128xf32> to vector<2x8x128xf32>
    %11 = arith.addf %7, %10 : vector<2x8x128xf32>
    %c0_5 = arith.constant 0 : index
    %c0_6 = arith.constant 0 : index
    %c0_7 = arith.constant 0 : index
    %12 = vector.load %arg3[%c0_5, %c0_6, %c0_7] : memref<2x1x128xf32, #tpu.memory_space<vmem>>, vector<2x1x128xf32>
    %13 = vector.broadcast %12 : vector<2x1x128xf32> to vector<2x8x128xf32>
    %14 = arith.mulf %11, %13 : vector<2x8x128xf32>
    %c0_8 = arith.constant 0 : index
    %c0_9 = arith.constant 0 : index
    %c0_10 = arith.constant 0 : index
    %15 = vector.load %arg6[%c0_8, %c0_9, %c0_10] : memref<2x8x128xf32, #tpu.memory_space<vmem>>, vector<2x8x128xf32>
    tpu.vector_store %arg6[%c0_8, %c0_9, %c0_10], %14 {strides = array<i32>} : memref<2x8x128xf32, #tpu.memory_space<vmem>>, vector<2x8x128xf32>,
    return
  }
  func.func @transform_0(%arg0: i32, %arg1: i32) -> (i32, i32, i32) {
    %c0_i32 = arith.constant 0 : i32
    %c0_i32_0 = arith.constant 0 : i32
    %c0_i32_1 = arith.constant 0 : i32
    return %arg0, %c0_i32, %c0_i32_0 : i32, i32, i32
  }
  func.func @transform_1(%arg0: i32, %arg1: i32) -> (i32, i32, i32) {
    %c0_i32 = arith.constant 0 : i32
    %c0_i32_0 = arith.constant 0 : i32
    return %arg0, %c0_i32, %arg1 : i32, i32, i32
  }
  func.func @transform_2(%arg0: i32, %arg1: i32) -> (i32, i32) {
    %c0_i32 = arith.constant 0 : i32
    %c0_i32_0 = arith.constant 0 : i32
    %c0_i32_1 = arith.constant 0 : i32
    return %c0_i32, %c0_i32_0 : i32, i32
  }
  func.func @transform_3(%arg0: i32, %arg1: i32) -> (i32, i32) {
    %c0_i32 = arith.constant 0 : i32
    %c0_i32_0 = arith.constant 0 : i32
    return %c0_i32, %arg1 : i32, i32
  }
  func.func @transform_4(%arg0: i32, %arg1: i32) -> (i32, i32, i32) {
    %c0_i32 = arith.constant 0 : i32
    %c0_i32_0 = arith.constant 0 : i32
    return %arg0, %c0_i32, %arg1 : i32, i32, i32
  }
}

</mosaic_0001>

<llo_original>
// kernel: tpu_custom_call.1
$region0: #{tpu_custom_call.1}
  #allocation0 [shape = 'u32[]', space=smem, size = 0x4, offset = 0x4, fixed_abs, tag = 'smem constant byte address 0x4 - core index']
  #allocation1 [shape = 'u32[144,128]{1,0:T(1,128)}', space=vmem, size = 0x12000, scoped, tag = 'internal scratch']
  %s0 = inlined_call_operand.hbm [shape: f32[2,8,32], index: 0, kind: input, shape index: {}]
  %s1 = inlined_call_operand.vmem [shape: f32[2,1,128], index: 1, kind: input, shape index: {}]
  %s2 = inlined_call_operand.hbm [shape: f32[32,128], index: 2, kind: input, shape index: {}]
  %s3 = inlined_call_operand.vmem [shape: f32[1,128], index: 3, kind: input, shape index: {}]
  %s4 = inlined_call_operand.hbm [shape: f32[2,8,128], index: 4, kind: output, shape index: {}]
  %s5 = sld [smem:[#allocation0]]
  $region34: #{tpu_custom_call.1} parent=0
    _
  %s7 = ssub.s32 1, %s5
  %s8 = scalar_select 0, %s7, %s5
  $region1: #{tpu_custom_call.1} parent=0
    #allocation2 [shape = 'u8[8192]{0}', space=vmem, size = 0x2000, scoped, tag = 'input window, operand 0, single buffered']
    #allocation3 [shape = 's32[1]{0}', space=sflag, size = 0x4, scoped, tag = 'scoped memory for tpu_custom_call.1']
    #allocation4 [shape = 's32[1]{0}', space=sflag, size = 0x4, scoped, tag = 'scoped memory for tpu_custom_call.1']
    #allocation5 [shape = 'u8[16384]{0}', space=vmem, size = 0x4000, scoped, tag = 'input window, operand 2, single buffered']
    #allocation6 [shape = 's32[1]{0}', space=sflag, size = 0x4, scoped, tag = 'scoped memory for tpu_custom_call.1']
    #allocation7 [shape = 'u8[8192]{0}', space=vmem, size = 0x2000, scoped, tag = 'output window, operand 0, single buffered']
    %9 = vsyncpa [#allocation3], 0
    %10 = vsyncpa [#allocation6], 0
    %11 = vsyncpa [#allocation4], 0
    // Predicated region
    $region2: #{tpu_custom_call.1} parent=1 // pred_check
      _
    $region3: #{tpu_custom_call.1} parent=1 // pred_check_branch
      %13 = sbr.rel (0) target = $region5
    $region4: #{tpu_custom_call.1} parent=1 // pred_region
      %s15 = ssub.s32 256, 256
      %16 = vsyncadd [#allocation3], %s15
      %s17 = sshll.u32 [#allocation2], 4
      %s18 = int_to_ptr.vmem [resolvable:$true] %s17
      %23 = dma.hbm_to_vmem [thread:$0]  %s0, 256, %s18, [#allocation3], 128, 128, 8
    $region5: #{tpu_custom_call.1} parent=1 // pred_fallthru
      _
    // Predicated region
    $region6: #{tpu_custom_call.1} parent=1 // pred_check
      _
    $region7: #{tpu_custom_call.1} parent=1 // pred_check_branch
      %25 = sbr.rel (0) target = $region9
    $region8: #{tpu_custom_call.1} parent=1 // pred_region
      _
    $region9: #{tpu_custom_call.1} parent=1 // pred_fallthru
      _
    // Predicated region
    $region10: #{tpu_custom_call.1} parent=1 // pred_check
      _
    $region11: #{tpu_custom_call.1} parent=1 // pred_check_branch
      %27 = sbr.rel (0) target = $region13
    $region12: #{tpu_custom_call.1} parent=1 // pred_region
      %s29 = ssub.s32 512, 512
      %30 = vsyncadd [#allocation6], %s29
      %s31 = sshll.u32 [#allocation5], 4
      %s32 = int_to_ptr.vmem [resolvable:$true] %s31
      %37 = dma.hbm_to_vmem [thread:$0]  %s2, 512, %s32, [#allocation6], 128, 128, 8
    $region13: #{tpu_custom_call.1} parent=1 // pred_fallthru
      _
    // Predicated region
    $region14: #{tpu_custom_call.1} parent=1 // pred_check
      _
    $region15: #{tpu_custom_call.1} parent=1 // pred_check_branch
      %39 = sbr.rel (0) target = $region17
    $region16: #{tpu_custom_call.1} parent=1 // pred_region
      _
    $region17: #{tpu_custom_call.1} parent=1 // pred_fallthru
      _
    // Predicated region
    $region18: #{tpu_custom_call.1} parent=1 // pred_check
      _
    $region19: #{tpu_custom_call.1} parent=1 // pred_check_branch
      %41 = sbr.rel (0) target = $region21
    $region20: #{tpu_custom_call.1} parent=1 // pred_region
      %42 = dma.done [#allocation3], 256
    $region21: #{tpu_custom_call.1} parent=1 // pred_fallthru
      _
    // Predicated region
    $region22: #{tpu_custom_call.1} parent=1 // pred_check
      _
    $region23: #{tpu_custom_call.1} parent=1 // pred_check_branch
      %44 = sbr.rel (0) target = $region25
    $region24: #{tpu_custom_call.1} parent=1 // pred_region
      %45 = dma.done [#allocation6], 512
    $region25: #{tpu_custom_call.1} parent=1 // pred_fallthru
      _
    %s46 = smul.u32 0, 128
    %s47 = sshra.s32 %s46, 7
    %s48 = sand.u32 %s46, 127
    %s49 = scalar_lea.vmem [#allocation5], %s47
    %v50 = vld [vmem:[%s49] sm:$0xff]
    %v51 = vld [vmem:[%s49 + $0x8] sm:$0xff]
    %v52 = vld [vmem:[%s49 + $0x10] sm:$0xff]
    %v53 = vld [vmem:[%s49 + $0x18] sm:$0xff]
    %v54 = vld [vmem:[#allocation2] sm:$0xff]
    %v55 = vld [vmem:[#allocation2 + $0x8] sm:$0xff]
    %vm56 = vcmask 261120
    %v58 = vsel %vm56, %v54, 0
    %v61 = vsel %vm56, %v55, 0
    %63 = vmatprep.subr.mxu0 0.0
    %64 = vmatpush1.msra.mxu0 %v50
    %65 = vmatprep.subr.mxu0 0.0
    %66 = vmatpush1.msra.mxu0 %v51
    %67 = vmatprep.subr.mxu0 0.0
    %68 = vmatpush1.msra.mxu0 %v52
    %69 = vmatprep.subr.mxu0 0.0
    %70 = vmatpush1.msra.mxu0 %v53
    %71 = vmatprep.subr.mxu0 0.0
    %72 = vmatpush1.msra.mxu0 0.0
    %73 = vmatprep.subr.mxu0 0.0
    %74 = vmatpush1.msra.mxu0 0.0
    %75 = vmatprep.subr.mxu0 0.0
    %76 = vmatpush1.msra.mxu0 0.0
    %77 = vmatprep.subr.mxu0 0.0
    %78 = vmatpush1.msra.mxu0 0.0
    %79 = vmatprep.subr.mxu0 0.0
    %80 = vmatpush1.msra.mxu0 0.0
    %81 = vmatprep.subr.mxu0 0.0
    %82 = vmatpush1.msra.mxu0 0.0
    %83 = vmatprep.subr.mxu0 0.0
    %84 = vmatpush1.msra.mxu0 0.0
    %85 = vmatprep.subr.mxu0 0.0
    %86 = vmatpush1.msra.mxu0 0.0
    %87 = vmatprep.subr.mxu0 0.0
    %88 = vmatpush1.msra.mxu0 0.0
    %89 = vmatprep.subr.mxu0 0.0
    %90 = vmatpush1.msra.mxu0 0.0
    %91 = vmatprep.subr.mxu0 0.0
    %92 = vmatpush1.msra.mxu0 0.0
    %93 = vmatprep.subr.mxu0 0.0
    %94 = vmatpush1.msra.mxu0 0.0
    %95 = vmatprep.subr.mxu0 0.0
    %96 = vmatpush1.msra.mxu0 0.0
    %97 = vmatprep.subr.mxu0 0.0
    %98 = vmatpush1.msra.mxu0 0.0
    %99 = vmatprep.subr.mxu0 0.0
    %100 = vmatpush1.msra.mxu0 0.0
    %101 = vmatprep.subr.mxu0 0.0
    %102 = vmatpush1.msra.mxu0 0.0
    %103 = vmatprep.subr.mxu0 0.0
    %104 = vmatpush1.msra.mxu0 0.0
    %105 = vmatprep.subr.mxu0 0.0
    %106 = vmatpush1.msra.mxu0 0.0
    %107 = vmatprep.subr.mxu0 0.0
    %108 = vmatpush1.msra.mxu0 0.0
    %109 = vmatprep.subr.mxu0 0.0
    %110 = vmatpush1.msra.mxu0 0.0
    %111 = vmatprep.subr.mxu0 0.0
    %112 = vmatpush1.msra.mxu0 0.0
    %113 = vmatprep.subr.mxu0 0.0
    %114 = vmatpush1.msra.mxu0 0.0
    %115 = vmatprep.subr.mxu0 0.0
    %116 = vmatpush1.msra.mxu0 0.0
    %117 = vmatprep.subr.mxu0 0.0
    %118 = vmatpush1.msra.mxu0 0.0
    %119 = vmatprep.subr.mxu0 0.0
    %120 = vmatpush1.msra.mxu0 0.0
    %121 = vmatprep.subr.mxu0 0.0
    %122 = vmatpush1.msra.mxu0 0.0
    %123 = vmatprep.subr.mxu0 0.0
    %124 = vmatpush1.msra.mxu0 0.0
    %125 = vmatprep.subr.mxu0 0.0
    %126 = vmatpush1.msra.mxu0 0.0
    %127 = vmatprep.mubr.f32.mxu0 0.0
    %128 = vmatmul.mubr.f32.gmra.mrb[0].mxu0 %v58
    %v129 = vpop.f32.mrb[0].mxu0
    %v130 = vadd.f32 0.0, %v129
    %v131 = vpop.f32.mrb[0].mxu0
    %132 = vmatprep.mubr.f32.mxu0 0.0
    %133 = vmatmul.mubr.f32.gmra.mrb[0].mxu0 %v61
    %v134 = vpop.f32.mrb[0].mxu0
    %v135 = vadd.f32 0.0, %v134
    %v136 = vpop.f32.mrb[0].mxu0
    %137 = vdwg.mxu0
    %v138 = vld [vmem:[%s3] sm:$0x1]
    %v140 = vlaneseq
    %v141 = vshrl.u32 %v140, 7
    %v142 = vsub.s32 0, %v141
    %v143 = vrot.slane %v138, %v142
    %v145 = vadd.f32 %v130, %v143
    %v146 = vadd.f32 %v135, %v143
    %v147 = vld [vmem:[%s1] sm:$0x1]
    %v148 = vld [vmem:[%s1 + $0x1] sm:$0x1]
    %v151 = vlaneseq
    %v152 = vshrl.u32 %v151, 7
    %v153 = vsub.s32 0, %v152
    %v154 = vrot.slane %v147, %v153
    %v155 = vlaneseq
    %v156 = vshrl.u32 %v155, 7
    %v157 = vsub.s32 0, %v156
    %v158 = vrot.slane %v148, %v157
    %v161 = vmul.f32 %v145, %v154
    %v162 = vmul.f32 %v146, %v158
    %163 = vst [vmem:[#allocation7] sm:$0xff] %v161
    %164 = vst [vmem:[#allocation7 + $0x8] sm:$0xff] %v162
    // Predicated region
    $region26: #{tpu_custom_call.1} parent=1 // pred_check
      _
    $region27: #{tpu_custom_call.1} parent=1 // pred_check_branch
      %166 = sbr.rel (0) target = $region29
    $region28: #{tpu_custom_call.1} parent=1 // pred_region
      %s168 = ssub.s32 256, 256
      %169 = vsyncadd [#allocation4], %s168
      %s170 = sshll.u32 [#allocation7], 4
      %s171 = int_to_ptr.vmem [resolvable:$true] %s170
      %176 = dma.vmem_to_hbm [thread:$0]  %s171, 256, %s4, [#allocation4], 128, 128, 8
    $region29: #{tpu_custom_call.1} parent=1 // pred_fallthru
      _
    // Predicated region
    $region30: #{tpu_custom_call.1} parent=1 // pred_check
      _
    $region31: #{tpu_custom_call.1} parent=1 // pred_check_branch
      %178 = sbr.rel (0) target = $region33
    $region32: #{tpu_custom_call.1} parent=1 // pred_region
      %179 = dma.done [#allocation4], 256
    $region33: #{tpu_custom_call.1} parent=1 // pred_fallthru
      _
    %180 = vsyncpa [#allocation3], 1
    %181 = vsyncpa [#allocation6], 1
    %182 = vsyncpa [#allocation4], 1

</llo_original>
